<compile_context>
chip_gen: v7x
topology: tpu7x:2x2x1
jax: 0.10.0
libtpu: 0.0.40
codegen_flags: <defaults>
</compile_context>

<pallas_src>
import functools

import jax
import jax.numpy as jnp
from jax import lax
from jax.experimental import pallas as pl
from jax.experimental.pallas import tpu as pltpu

_ALPHA = 0.5        # Tversky false-positive multiplier (module default)
_BETA = 0.5         # Tversky false-negative multiplier (module default)
_DICE_EPS = 1e-6
_NUM_Q = 6          # inter, prob_sum, target_cnt, nll, pred_cnt, pred∩target
_QROWS = 8          # rows per class in the accumulator (6 used + 2 pad)
_CHUNK = 8          # compute chunk (sublanes) inside one DMA'd row-tile


def _make_kernel(num_classes, tile_r, chunk, tiles_per_split, rows_valid,
                 needs_mask):
    C = num_classes
    n_chunks = tile_r // chunk
    assert n_chunks * chunk == tile_r

    def kernel(pred_ref, tgt_ref, acc_ref, x_scr, e_scr):
        # pred_ref: (1, C, tile_r, 128) logits (f32 / bf16)
        # tgt_ref : (1, tile_r, 128) int32 labels
        # acc_ref : (1, 1, 8*C, 128) f32 resident accumulator; rows
        #           [c*8, c*8+6) hold the 6 partial sums for class c.
        # x_scr   : (C, chunk, 128) f32 — logits cast once per chunk
        # e_scr   : (C, chunk, 128) f32 — exp(x - max) cached between passes
        t = pl.program_id(2)

        @pl.when(t == 0)
        def _init():
            acc_ref[...] = jnp.zeros_like(acc_ref)

        if needs_mask:
            split = pl.program_id(0)
            tile_row0 = (split * tiles_per_split + t) * tile_r

        @pl.loop(0, n_chunks)
        def _chunk(ci):
            r0 = pl.multiple_of(ci * chunk, chunk)
            tgt = tgt_ref[0, pl.ds(r0, chunk), :]

            if needs_mask:
                row = tile_row0 + r0 + lax.broadcasted_iota(
                    jnp.int32, (chunk, 128), 0)
                valid = row < rows_valid
                tgt = jnp.where(valid, tgt, -1)

            # ---- pass 1: cast once into scratch; running max + argmax -------
            x0 = pred_ref[0, 0, pl.ds(r0, chunk), :].astype(jnp.float32)
            if needs_mask:
                x0 = jnp.where(valid, x0, 0.0)
            x_scr[0] = x0
            m = x0
            idx = jnp.zeros((chunk, 128), jnp.int32)
            for c in range(1, C):
                xc = pred_ref[0, c, pl.ds(r0, chunk), :].astype(jnp.float32)
                if needs_mask:
                    xc = jnp.where(valid, xc, 0.0)
                x_scr[c] = xc
                gt = xc > m
                m = jnp.where(gt, xc, m)
                idx = jnp.where(gt, jnp.int32(c), idx)
            if needs_mask:
                idx = jnp.where(valid, idx, -1)

            # ---- pass 2: cache exp(x - m); one exp per class per pixel ------
            s = jnp.zeros((chunk, 128), jnp.float32)
            for c in range(C):
                e = jnp.exp(x_scr[c] - m)
                e_scr[c] = e
                s = s + e
            inv_s = 1.0 / s                 # exact; approx recip is too lossy
            lse = m + jnp.log(s)
            if needs_mask:
                inv_s = jnp.where(valid, inv_s, 0.0)

            # ---- pass 3: lane-width partials; one aligned vreg RMW per class
            pad = jnp.zeros((_QROWS - _NUM_Q, 128), jnp.float32)
            for c in range(C):
                x = x_scr[c]
                p = e_scr[c] * inv_s        # softmax probability
                oh = tgt == c               # target one-hot (bool)
                pc = idx == c               # argmax one-hot (bool)
                rows = [
                    jnp.sum(jnp.where(oh, p, 0.0), axis=0, keepdims=True),
                    jnp.sum(p, axis=0, keepdims=True),
                    jnp.sum(jnp.where(oh, 1.0, 0.0), axis=0, keepdims=True),
                    jnp.sum(jnp.where(oh, lse - x, 0.0), axis=0, keepdims=True),
                    jnp.sum(jnp.where(pc, 1.0, 0.0), axis=0, keepdims=True),
                    jnp.sum(jnp.where(oh & pc, 1.0, 0.0), axis=0,
                            keepdims=True),
                ]
                contrib = jnp.concatenate(rows + [pad], axis=0)   # (8, 128)
                acc_ref[0, 0, pl.ds(c * _QROWS, _QROWS), :] += contrib

    return kernel


def _vmem_budgets():
    """(double-buffered input budget, vmem_limit cap), generation aware."""
    vmem_cap = 64 * 1024 * 1024            # conservative (v7x-sized) default
    try:
        info = pltpu.get_tpu_info()
        vmem_cap = int(getattr(info, "vmem_capacity_bytes", vmem_cap))
    except Exception:
        pass
    if vmem_cap <= 64 * 1024 * 1024:       # v7x: 64 MiB per TensorCore
        return 12 * 1024 * 1024, 48 * 1024 * 1024
    return 24 * 1024 * 1024, 64 * 1024 * 1024   # v5e / v6e: 128 MiB VMEM


def _choose_tiling(rows, num_classes, pred_itemsize, batch, input_budget,
                   max_rows_per_tile):
    """Pick the BlockSpec row-tile.

    Returns (tile_r, num_tiles, needs_mask).  tile_r is either == rows (small
    images) or a multiple of 8; num_tiles = ceil(rows / tile_r); needs_mask is
    True when the last tile hangs off the end of the image (handled with
    in-kernel row masking)."""
    bytes_per_row = 2 * (num_classes * pred_itemsize + 4) * 128   # dbl buffered
    budget_rows = max(_CHUNK, int(input_budget // bytes_per_row))
    if max_rows_per_tile is not None:
        budget_rows = max(_CHUNK, min(budget_rows, int(max_rows_per_tile)))
    budget_rows = (budget_rows // _CHUNK) * _CHUNK

    if rows <= _CHUNK:
        return rows, 1, False

    cap = budget_rows
    if batch == 1 and rows >= 2 * _CHUNK:
        # Keep at least two row-tiles so the split axis can feed both
        # TensorCores of a v7x megacore even at batch size 1.
        cap = min(cap, max(_CHUNK, ((rows // 2) // _CHUNK) * _CHUNK))

    best = None
    d = _CHUNK
    limit = min(cap, rows)
    while d <= limit:
        if rows % d == 0:
            best = d
        d += _CHUNK
    if best is not None:
        return best, rows // best, False
    tile = min(cap, (rows // _CHUNK) * _CHUNK)
    return tile, -(-rows // tile), True


@functools.partial(
    jax.jit,
    static_argnames=("num_classes", "cew", "tvw", "max_rows_per_tile",
                     "input_budget", "vmem_cap"))
def _loss_impl(pred, target, *, num_classes, cew, tvw, max_rows_per_tile,
               input_budget, vmem_cap):
    N, C, H, W = pred.shape
    if C != num_classes:
        raise ValueError("pred channel dim must equal num_classes")
    P = H * W
    if P % 128 != 0 or 128 % W != 0:
        # TODO(synk): general W / ragged pixel counts need a padded + masked
        # lane layout; only the lane-aligned case (W | 128, H*W % 128 == 0)
        # is implemented.
        raise NotImplementedError(
            "Requires W to divide 128 and H*W to be a multiple of 128.")
    R = P // 128

    if pred.dtype not in (jnp.dtype(jnp.float32), jnp.dtype(jnp.bfloat16)):
        pred = pred.astype(jnp.float32)

    tile_r, num_tiles, needs_mask = _choose_tiling(
        R, C, pred.dtype.itemsize, N, input_budget, max_rows_per_tile)
    chunk = min(_CHUNK, tile_r)
    nsplit = 2 if (num_tiles >= 2 and num_tiles % 2 == 0) else 1
    t_per = num_tiles // nsplit

    pred4 = pred.reshape(N, C, R, 128)        # free view (trailing dims only)
    # TODO(synk): stream int8/uint8 labels directly instead of widening to
    # int32 in HBM (saves label bandwidth, matters most on v5e).
    tgt3 = target.reshape(N, R, 128).astype(jnp.int32)

    in_block = (C * pred.dtype.itemsize + 4) * 128 * tile_r
    out_block = _QROWS * C * 128 * 4
    scratch = 2 * C * chunk * 128 * 4
    vmem_limit = int(min(vmem_cap,
                         2 * in_block + 2 * out_block + scratch + (8 << 20)))

    acc = pl.pallas_call(
        _make_kernel(C, tile_r, chunk, t_per, R, needs_mask),
        out_shape=jax.ShapeDtypeStruct((nsplit, N, _QROWS * C, 128),
                                       jnp.float32),
        grid=(nsplit, N, t_per),
        in_specs=[
            pl.BlockSpec((1, C, tile_r, 128),
                         lambda s, n, t: (n, 0, s * t_per + t, 0)),
            pl.BlockSpec((1, tile_r, 128),
                         lambda s, n, t: (n, s * t_per + t, 0)),
        ],
        out_specs=pl.BlockSpec((1, 1, _QROWS * C, 128),
                               lambda s, n, t: (s, n, 0, 0)),
        scratch_shapes=[
            pltpu.VMEM((C, chunk, 128), jnp.float32),   # f32-cast logits
            pltpu.VMEM((C, chunk, 128), jnp.float32),   # exp(x - max) cache
        ],
        compiler_params=pltpu.CompilerParams(
            dimension_semantics=("parallel", "parallel", "arbitrary"),
            vmem_limit_bytes=vmem_limit,
        ),
    )(pred4, tgt3)

    # ---- tiny scalar epilogue on the (C, 128) lane partials ------------------
    acc = jnp.sum(acc, axis=(0, 1)).reshape(C, _QROWS, 128)
    inter_l = acc[:, 0, :]     # sum softmax_prob * target_onehot
    psum_l = acc[:, 1, :]      # sum softmax_prob
    ohsum_l = acc[:, 2, :]     # target-class pixel count
    nll_l = acc[:, 3, :]       # sum -log p_target over target-class pixels
    pcnt_l = acc[:, 4, :]      # argmax-class pixel count
    pci_l = acc[:, 5, :]       # argmax ∩ target pixel count

    # class_dice weights: w[c] = 1 - 2*inter / (|pred==c| + |target==c| + eps)
    tcount = jnp.sum(ohsum_l, axis=-1)
    pcount = jnp.sum(pcnt_l, axis=-1)
    inter_d = jnp.sum(pci_l, axis=-1)
    w = 1.0 - 2.0 * inter_d / (pcount + tcount + _DICE_EPS)

    # weighted cross entropy (reduction='mean' with per-class weights)
    nll_sum = jnp.sum(nll_l, axis=-1)
    ce = jnp.sum(w * nll_sum) / jnp.sum(w * tcount)

    # Tversky loss: the PyTorch module reduces over dims (0, 2) of [N,C,H,W],
    # i.e. keeps a (C, W) table.  Lane l holds pixel column w = l % W (W | 128).
    def fold(a):                                    # (C, 128) -> (C, W)
        return jnp.sum(a.reshape(C, 128 // W, W), axis=1)

    inter_cw = fold(inter_l)
    fps_cw = fold(psum_l) - inter_cw                # sum p * (1 - t)
    fns_cw = fold(ohsum_l) - inter_cw               # sum (1 - p) * t
    # No epsilon in the denominator: matches the reference module exactly.
    ratio = inter_cw / (inter_cw + _ALPHA * fps_cw + _BETA * fns_cw)
    tv = 1.0 - jnp.mean(ratio)

    return cew * ce + tvw * tv


def tversky_ce_dice_weighted_loss(pred, target, num_classes,
                                  cross_entropy_weight=0.5,
                                  tversky_weight=0.5,
                                  max_rows_per_tile=None):
    """pred: [N, C, H, W] float logits; target: [N, H, W] integer labels."""
    # Tolerant check (the module uses exact float equality, which spuriously
    # rejects pairs like 0.3 + 0.7).
    if abs(cross_entropy_weight + tversky_weight - 1.0) > 1e-6:
        raise ValueError(
            "Cross Entropy weight and Tversky weight should sum to 1")
    input_budget, vmem_cap = _vmem_budgets()
    return _loss_impl(
        pred, target, num_classes=int(num_classes),
        cew=float(cross_entropy_weight), tvw=float(tversky_weight),
        max_rows_per_tile=max_rows_per_tile,
        input_budget=int(input_budget), vmem_cap=int(vmem_cap))


# --------- pure-JAX reference (mirrors the PyTorch semantics exactly) ---------
def _reference_loss(pred, target, num_classes, cew=0.5, tvw=0.5):
    C = num_classes
    probs = jax.nn.softmax(pred, axis=1)                       # [N,C,H,W]
    oh = jax.nn.one_hot(target, C, axis=1, dtype=jnp.float32)  # [N,C,H,W]
    inter = jnp.sum(probs * oh, axis=(0, 2))                   # [C, W]
    fps = jnp.sum(probs * (1 - oh), axis=(0, 2))
    fns = jnp.sum((1 - probs) * oh, axis=(0, 2))
    tv = 1.0 - jnp.mean(inter / (inter + 0.5 * fps + 0.5 * fns))
    pred_class = jnp.argmax(pred, axis=1)                      # [N,H,W]
    w = []
    for c in range(C):
        p = pred_class == c
        t = target == c
        i = jnp.sum(p & t).astype(jnp.float32)
        u = jnp.sum(p) + jnp.sum(t) + 1e-6
        w.append(1.0 - 2.0 * i / u)
    w = jnp.stack(w)                                           # [C]
    logp = jax.nn.log_softmax(pred, axis=1)
    nll = -jnp.take_along_axis(logp, target[:, None, :, :], axis=1)[:, 0]
    wi = w[target]
    ce = jnp.sum(wi * nll) / jnp.sum(wi)
    return cew * ce + tvw * tv


if __name__ == "__main__":
    num_classes = 4
    keys = jax.random.split(jax.random.PRNGKey(0), 6)

    # Test 1: module-sized input (single row-tile per image).
    pred = jax.random.normal(keys[0], (2, num_classes, 16, 16),
                             dtype=jnp.float32)
    target = jax.random.randint(keys[1], (2, 16, 16), 0, num_classes,
                                dtype=jnp.int32)
    loss = jax.block_until_ready(
        tversky_ce_dice_weighted_loss(pred, target, num_classes))
    ref = _reference_loss(pred, target, num_classes)
    assert jnp.allclose(loss, ref, rtol=1e-4, atol=1e-5), (loss, ref)

    # Test 2: several row-tiles per image (forced small tile) — exercises the
    # resident-accumulator "arbitrary" axis and the 2-way megacore split.
    pred2 = jax.random.normal(keys[2], (2, num_classes, 64, 32),
                              dtype=jnp.float32)
    target2 = jax.random.randint(keys[3], (2, 64, 32), 0, num_classes,
                                 dtype=jnp.int32)
    loss2 = jax.block_until_ready(
        tversky_ce_dice_weighted_loss(pred2, target2, num_classes,
                                      max_rows_per_tile=8))
    ref2 = _reference_loss(pred2, target2, num_classes)
    assert jnp.allclose(loss2, ref2, rtol=1e-4, atol=1e-5), (loss2, ref2)

    # Test 3: row count not divisible by the tile (R = 10, tile = 8) —
    # exercises the in-kernel masking of the ragged final tile and the
    # megacore split at batch size 1.
    pred3 = jax.random.normal(keys[4], (1, num_classes, 40, 32),
                              dtype=jnp.float32)
    target3 = jax.random.randint(keys[5], (1, 40, 32), 0, num_classes,
                                 dtype=jnp.int32)
    loss3 = jax.block_until_ready(
        tversky_ce_dice_weighted_loss(pred3, target3, num_classes))
    ref3 = _reference_loss(pred3, target3, num_classes)
    assert jnp.allclose(loss3, ref3, rtol=1e-4, atol=1e-5), (loss3, ref3)

    print("KERNEL_OK")
</pallas_src>

<mosaic_0001>
module attributes {stable_mosaic.version = 11 : i64} {
  func.func @kernel(%arg0: i32, %arg1: i32, %arg2: i32, %arg3: memref<1x4x2x128xf32, #tpu.memory_space<vmem>>, %arg4: memref<1x2x128xi32, #tpu.memory_space<vmem>>, %arg5: memref<1x1x32x128xf32, #tpu.memory_space<vmem>>, %arg6: memref<4x2x128xf32, #tpu.memory_space<vmem>>, %arg7: memref<4x2x128xf32, #tpu.memory_space<vmem>>) attributes {dimension_semantics = [#tpu.dimension_semantics<parallel>, #tpu.dimension_semantics<parallel>, #tpu.dimension_semantics<arbitrary>], iteration_bounds = array<i64: 1, 2, 1>, scalar_prefetch = 0 : i64, scratch_operands = 2 : i64, tpu.core_type = #tpu.core_type<tc>, window_params = [{transform_indices = @transform_0, window_bounds = array<i64: 1, 4, 2, 128>}, {transform_indices = @transform_1, window_bounds = array<i64: 1, 2, 128>}, {transform_indices = @transform_2, window_bounds = array<i64: 1, 1, 32, 128>}]} {
    %c0_i32 = arith.constant 0 : i32
    %0 = arith.cmpi eq, %arg2, %c0_i32 : i32
    %1 = arith.extui %0 : i1 to i32
    %c0_i32_0 = arith.constant 0 : i32
    %2 = arith.cmpi ne, %1, %c0_i32_0 : i32
    scf.if %2 {
      %cst_172 = arith.constant 0.000000e+00 : f32
      %257 = vector.broadcast %cst_172 : f32 to vector<1x1x32x128xf32>
      %c0_173 = arith.constant 0 : index
      %c0_174 = arith.constant 0 : index
      %c0_175 = arith.constant 0 : index
      %c0_176 = arith.constant 0 : index
      %258 = vector.load %arg5[%c0_173, %c0_174, %c0_175, %c0_176] : memref<1x1x32x128xf32, #tpu.memory_space<vmem>>, vector<1x1x32x128xf32>
      tpu.vector_store %arg5[%c0_173, %c0_174, %c0_175, %c0_176], %257 {strides = array<i32>} : memref<1x1x32x128xf32, #tpu.memory_space<vmem>>, vector<1x1x32x128xf32>,
    } else {
    }
    %c0_i32_1 = arith.constant 0 : i32
    %c1_i32 = arith.constant 1 : i32
    %3 = arith.muli %c0_i32_1, %c1_i32 : i32
    %c0_i32_2 = arith.constant 0 : i32
    %4 = arith.addi %c0_i32_2, %3 : i32
    %c2_i32 = arith.constant 2 : i32
    %5 = arith.muli %4, %c2_i32 : i32
    %6 = tpu.assume_multiple %5, 2 : i32
    %c0 = arith.constant 0 : index
    %7 = arith.index_cast %6 : i32 to index
    %c0_3 = arith.constant 0 : index
    %8 = vector.load %arg4[%c0, %7, %c0_3] : memref<1x2x128xi32, #tpu.memory_space<vmem>>, vector<1x2x128xi32>
    %9 = vector.shape_cast %8 : vector<1x2x128xi32> to vector<2x128xi32>
    %c0_4 = arith.constant 0 : index
    %c0_5 = arith.constant 0 : index
    %10 = arith.index_cast %6 : i32 to index
    %c0_6 = arith.constant 0 : index
    %11 = vector.load %arg3[%c0_4, %c0_5, %10, %c0_6] : memref<1x4x2x128xf32, #tpu.memory_space<vmem>>, vector<1x1x2x128xf32>
    %12 = vector.shape_cast %11 : vector<1x1x2x128xf32> to vector<2x128xf32>
    %c0_7 = arith.constant 0 : index
    %c0_8 = arith.constant 0 : index
    %c0_9 = arith.constant 0 : index
    %13 = vector.load %arg6[%c0_7, %c0_8, %c0_9] : memref<4x2x128xf32, #tpu.memory_space<vmem>>, vector<1x2x128xf32>
    %14 = vector.shape_cast %13 : vector<1x2x128xf32> to vector<2x128xf32>
    %15 = vector.shape_cast %12 : vector<2x128xf32> to vector<1x2x128xf32>
    tpu.vector_store %arg6[%c0_7, %c0_8, %c0_9], %15 {strides = array<i32>} : memref<4x2x128xf32, #tpu.memory_space<vmem>>, vector<1x2x128xf32>,
    %c0_i32_10 = arith.constant 0 : i32
    %16 = vector.broadcast %c0_i32_10 : i32 to vector<2x128xi32>
    %c0_11 = arith.constant 0 : index
    %c1 = arith.constant 1 : index
    %17 = arith.index_cast %6 : i32 to index
    %c0_12 = arith.constant 0 : index
    %18 = vector.load %arg3[%c0_11, %c1, %17, %c0_12] : memref<1x4x2x128xf32, #tpu.memory_space<vmem>>, vector<1x1x2x128xf32>
    %19 = vector.shape_cast %18 : vector<1x1x2x128xf32> to vector<2x128xf32>
    %c1_13 = arith.constant 1 : index
    %c0_14 = arith.constant 0 : index
    %c0_15 = arith.constant 0 : index
    %20 = vector.load %arg6[%c1_13, %c0_14, %c0_15] : memref<4x2x128xf32, #tpu.memory_space<vmem>>, vector<1x2x128xf32>
    %21 = vector.shape_cast %20 : vector<1x2x128xf32> to vector<2x128xf32>
    %22 = vector.shape_cast %19 : vector<2x128xf32> to vector<1x2x128xf32>
    tpu.vector_store %arg6[%c1_13, %c0_14, %c0_15], %22 {strides = array<i32>} : memref<4x2x128xf32, #tpu.memory_space<vmem>>, vector<1x2x128xf32>,
    %23 = arith.cmpf ogt, %19, %12 : vector<2x128xf32>
    %24 = arith.select %23, %19, %12 : vector<2x128xi1>, vector<2x128xf32>
    %c1_i32_16 = arith.constant 1 : i32
    %25 = vector.broadcast %c1_i32_16 : i32 to vector<2x128xi32>
    %26 = arith.select %23, %25, %16 : vector<2x128xi1>, vector<2x128xi32>
    %c0_17 = arith.constant 0 : index
    %c2 = arith.constant 2 : index
    %27 = arith.index_cast %6 : i32 to index
    %c0_18 = arith.constant 0 : index
    %28 = vector.load %arg3[%c0_17, %c2, %27, %c0_18] : memref<1x4x2x128xf32, #tpu.memory_space<vmem>>, vector<1x1x2x128xf32>
    %29 = vector.shape_cast %28 : vector<1x1x2x128xf32> to vector<2x128xf32>
    %c2_19 = arith.constant 2 : index
    %c0_20 = arith.constant 0 : index
    %c0_21 = arith.constant 0 : index
    %30 = vector.load %arg6[%c2_19, %c0_20, %c0_21] : memref<4x2x128xf32, #tpu.memory_space<vmem>>, vector<1x2x128xf32>
    %31 = vector.shape_cast %30 : vector<1x2x128xf32> to vector<2x128xf32>
    %32 = vector.shape_cast %29 : vector<2x128xf32> to vector<1x2x128xf32>
    tpu.vector_store %arg6[%c2_19, %c0_20, %c0_21], %32 {strides = array<i32>} : memref<4x2x128xf32, #tpu.memory_space<vmem>>, vector<1x2x128xf32>,
    %33 = arith.cmpf ogt, %29, %24 : vector<2x128xf32>
    %34 = arith.select %33, %29, %24 : vector<2x128xi1>, vector<2x128xf32>
    %c2_i32_22 = arith.constant 2 : i32
    %35 = vector.broadcast %c2_i32_22 : i32 to vector<2x128xi32>
    %36 = arith.select %33, %35, %26 : vector<2x128xi1>, vector<2x128xi32>
    %c0_23 = arith.constant 0 : index
    %c3 = arith.constant 3 : index
    %37 = arith.index_cast %6 : i32 to index
    %c0_24 = arith.constant 0 : index
    %38 = vector.load %arg3[%c0_23, %c3, %37, %c0_24] : memref<1x4x2x128xf32, #tpu.memory_space<vmem>>, vector<1x1x2x128xf32>
    %39 = vector.shape_cast %38 : vector<1x1x2x128xf32> to vector<2x128xf32>
    %c3_25 = arith.constant 3 : index
    %c0_26 = arith.constant 0 : index
    %c0_27 = arith.constant 0 : index
    %40 = vector.load %arg6[%c3_25, %c0_26, %c0_27] : memref<4x2x128xf32, #tpu.memory_space<vmem>>, vector<1x2x128xf32>
    %41 = vector.shape_cast %40 : vector<1x2x128xf32> to vector<2x128xf32>
    %42 = vector.shape_cast %39 : vector<2x128xf32> to vector<1x2x128xf32>
    tpu.vector_store %arg6[%c3_25, %c0_26, %c0_27], %42 {strides = array<i32>} : memref<4x2x128xf32, #tpu.memory_space<vmem>>, vector<1x2x128xf32>,
    %43 = arith.cmpf ogt, %39, %34 : vector<2x128xf32>
    %44 = arith.select %43, %39, %34 : vector<2x128xi1>, vector<2x128xf32>
    %c3_i32 = arith.constant 3 : i32
    %45 = vector.broadcast %c3_i32 : i32 to vector<2x128xi32>
    %46 = arith.select %43, %45, %36 : vector<2x128xi1>, vector<2x128xi32>
    %cst = arith.constant 0.000000e+00 : f32
    %47 = vector.broadcast %cst : f32 to vector<2x128xf32>
    %c0_28 = arith.constant 0 : index
    %c0_29 = arith.constant 0 : index
    %c0_30 = arith.constant 0 : index
    %48 = vector.load %arg6[%c0_28, %c0_29, %c0_30] : memref<4x2x128xf32, #tpu.memory_space<vmem>>, vector<1x2x128xf32>
    %49 = vector.shape_cast %48 : vector<1x2x128xf32> to vector<2x128xf32>
    %50 = arith.subf %49, %44 : vector<2x128xf32>
    %51 = math.exp %50 : vector<2x128xf32>
    %c0_31 = arith.constant 0 : index
    %c0_32 = arith.constant 0 : index
    %c0_33 = arith.constant 0 : index
    %52 = vector.load %arg7[%c0_31, %c0_32, %c0_33] : memref<4x2x128xf32, #tpu.memory_space<vmem>>, vector<1x2x128xf32>
    %53 = vector.shape_cast %52 : vector<1x2x128xf32> to vector<2x128xf32>
    %54 = vector.shape_cast %51 : vector<2x128xf32> to vector<1x2x128xf32>
    tpu.vector_store %arg7[%c0_31, %c0_32, %c0_33], %54 {strides = array<i32>} : memref<4x2x128xf32, #tpu.memory_space<vmem>>, vector<1x2x128xf32>,
    %55 = arith.addf %47, %51 : vector<2x128xf32>
    %c1_34 = arith.constant 1 : index
    %c0_35 = arith.constant 0 : index
    %c0_36 = arith.constant 0 : index
    %56 = vector.load %arg6[%c1_34, %c0_35, %c0_36] : memref<4x2x128xf32, #tpu.memory_space<vmem>>, vector<1x2x128xf32>
    %57 = vector.shape_cast %56 : vector<1x2x128xf32> to vector<2x128xf32>
    %58 = arith.subf %57, %44 : vector<2x128xf32>
    %59 = math.exp %58 : vector<2x128xf32>
    %c1_37 = arith.constant 1 : index
    %c0_38 = arith.constant 0 : index
    %c0_39 = arith.constant 0 : index
    %60 = vector.load %arg7[%c1_37, %c0_38, %c0_39] : memref<4x2x128xf32, #tpu.memory_space<vmem>>, vector<1x2x128xf32>
    %61 = vector.shape_cast %60 : vector<1x2x128xf32> to vector<2x128xf32>
    %62 = vector.shape_cast %59 : vector<2x128xf32> to vector<1x2x128xf32>
    tpu.vector_store %arg7[%c1_37, %c0_38, %c0_39], %62 {strides = array<i32>} : memref<4x2x128xf32, #tpu.memory_space<vmem>>, vector<1x2x128xf32>,
    %63 = arith.addf %55, %59 : vector<2x128xf32>
    %c2_40 = arith.constant 2 : index
    %c0_41 = arith.constant 0 : index
    %c0_42 = arith.constant 0 : index
    %64 = vector.load %arg6[%c2_40, %c0_41, %c0_42] : memref<4x2x128xf32, #tpu.memory_space<vmem>>, vector<1x2x128xf32>
    %65 = vector.shape_cast %64 : vector<1x2x128xf32> to vector<2x128xf32>
    %66 = arith.subf %65, %44 : vector<2x128xf32>
    %67 = math.exp %66 : vector<2x128xf32>
    %c2_43 = arith.constant 2 : index
    %c0_44 = arith.constant 0 : index
    %c0_45 = arith.constant 0 : index
    %68 = vector.load %arg7[%c2_43, %c0_44, %c0_45] : memref<4x2x128xf32, #tpu.memory_space<vmem>>, vector<1x2x128xf32>
    %69 = vector.shape_cast %68 : vector<1x2x128xf32> to vector<2x128xf32>
    %70 = vector.shape_cast %67 : vector<2x128xf32> to vector<1x2x128xf32>
    tpu.vector_store %arg7[%c2_43, %c0_44, %c0_45], %70 {strides = array<i32>} : memref<4x2x128xf32, #tpu.memory_space<vmem>>, vector<1x2x128xf32>,
    %71 = arith.addf %63, %67 : vector<2x128xf32>
    %c3_46 = arith.constant 3 : index
    %c0_47 = arith.constant 0 : index
    %c0_48 = arith.constant 0 : index
    %72 = vector.load %arg6[%c3_46, %c0_47, %c0_48] : memref<4x2x128xf32, #tpu.memory_space<vmem>>, vector<1x2x128xf32>
    %73 = vector.shape_cast %72 : vector<1x2x128xf32> to vector<2x128xf32>
    %74 = arith.subf %73, %44 : vector<2x128xf32>
    %75 = math.exp %74 : vector<2x128xf32>
    %c3_49 = arith.constant 3 : index
    %c0_50 = arith.constant 0 : index
    %c0_51 = arith.constant 0 : index
    %76 = vector.load %arg7[%c3_49, %c0_50, %c0_51] : memref<4x2x128xf32, #tpu.memory_space<vmem>>, vector<1x2x128xf32>
    %77 = vector.shape_cast %76 : vector<1x2x128xf32> to vector<2x128xf32>
    %78 = vector.shape_cast %75 : vector<2x128xf32> to vector<1x2x128xf32>
    tpu.vector_store %arg7[%c3_49, %c0_50, %c0_51], %78 {strides = array<i32>} : memref<4x2x128xf32, #tpu.memory_space<vmem>>, vector<1x2x128xf32>,
    %79 = arith.addf %71, %75 : vector<2x128xf32>
    %cst_52 = arith.constant 1.000000e+00 : f32
    %80 = vector.broadcast %cst_52 : f32 to vector<2x128xf32>
    %81 = arith.divf %80, %79 : vector<2x128xf32>
    %82 = math.log %79 : vector<2x128xf32>
    %83 = arith.addf %44, %82 : vector<2x128xf32>
    %cst_53 = arith.constant 0.000000e+00 : f32
    %84 = vector.broadcast %cst_53 : f32 to vector<2x128xf32>
    %c0_54 = arith.constant 0 : index
    %c0_55 = arith.constant 0 : index
    %c0_56 = arith.constant 0 : index
    %85 = vector.load %arg6[%c0_54, %c0_55, %c0_56] : memref<4x2x128xf32, #tpu.memory_space<vmem>>, vector<1x2x128xf32>
    %86 = vector.shape_cast %85 : vector<1x2x128xf32> to vector<2x128xf32>
    %c0_57 = arith.constant 0 : index
    %c0_58 = arith.constant 0 : index
    %c0_59 = arith.constant 0 : index
    %87 = vector.load %arg7[%c0_57, %c0_58, %c0_59] : memref<4x2x128xf32, #tpu.memory_space<vmem>>, vector<1x2x128xf32>
    %88 = vector.shape_cast %87 : vector<1x2x128xf32> to vector<2x128xf32>
    %89 = arith.mulf %88, %81 : vector<2x128xf32>
    %c0_i32_60 = arith.constant 0 : i32
    %90 = vector.broadcast %c0_i32_60 : i32 to vector<2x128xi32>
    %91 = arith.cmpi eq, %9, %90 : vector<2x128xi32>
    %c0_i32_61 = arith.constant 0 : i32
    %92 = vector.broadcast %c0_i32_61 : i32 to vector<2x128xi32>
    %93 = arith.cmpi eq, %46, %92 : vector<2x128xi32>
    %cst_62 = arith.constant 0.000000e+00 : f32
    %94 = vector.broadcast %cst_62 : f32 to vector<2x128xf32>
    %95 = arith.select %91, %89, %94 : vector<2x128xi1>, vector<2x128xf32>
    %cst_63 = arith.constant dense<0.000000e+00> : vector<128xf32>
    %96 = vector.multi_reduction <add>, %95, %cst_63 [0] : vector<2x128xf32> to vector<128xf32>
    %97 = vector.shape_cast %96 : vector<128xf32> to vector<1x128xf32>
    %cst_64 = arith.constant dense<0.000000e+00> : vector<128xf32>
    %98 = vector.multi_reduction <add>, %89, %cst_64 [0] : vector<2x128xf32> to vector<128xf32>
    %99 = vector.shape_cast %98 : vector<128xf32> to vector<1x128xf32>
    %cst_65 = arith.constant 1.000000e+00 : f32
    %cst_66 = arith.constant 0.000000e+00 : f32
    %100 = vector.broadcast %cst_65 : f32 to vector<2x128xf32>
    %101 = vector.broadcast %cst_66 : f32 to vector<2x128xf32>
    %102 = arith.select %91, %100, %101 : vector<2x128xi1>, vector<2x128xf32>
    %cst_67 = arith.constant dense<0.000000e+00> : vector<128xf32>
    %103 = vector.multi_reduction <add>, %102, %cst_67 [0] : vector<2x128xf32> to vector<128xf32>
    %104 = vector.shape_cast %103 : vector<128xf32> to vector<1x128xf32>
    %105 = arith.subf %83, %86 : vector<2x128xf32>
    %cst_68 = arith.constant 0.000000e+00 : f32
    %106 = vector.broadcast %cst_68 : f32 to vector<2x128xf32>
    %107 = arith.select %91, %105, %106 : vector<2x128xi1>, vector<2x128xf32>
    %cst_69 = arith.constant dense<0.000000e+00> : vector<128xf32>
    %108 = vector.multi_reduction <add>, %107, %cst_69 [0] : vector<2x128xf32> to vector<128xf32>
    %109 = vector.shape_cast %108 : vector<128xf32> to vector<1x128xf32>
    %cst_70 = arith.constant 1.000000e+00 : f32
    %cst_71 = arith.constant 0.000000e+00 : f32
    %110 = vector.broadcast %cst_70 : f32 to vector<2x128xf32>
    %111 = vector.broadcast %cst_71 : f32 to vector<2x128xf32>
    %112 = arith.select %93, %110, %111 : vector<2x128xi1>, vector<2x128xf32>
    %cst_72 = arith.constant dense<0.000000e+00> : vector<128xf32>
    %113 = vector.multi_reduction <add>, %112, %cst_72 [0] : vector<2x128xf32> to vector<128xf32>
    %114 = vector.shape_cast %113 : vector<128xf32> to vector<1x128xf32>
    %115 = arith.andi %91, %93 : vector<2x128xi1>
    %cst_73 = arith.constant 1.000000e+00 : f32
    %cst_74 = arith.constant 0.000000e+00 : f32
    %116 = vector.broadcast %cst_73 : f32 to vector<2x128xf32>
    %117 = vector.broadcast %cst_74 : f32 to vector<2x128xf32>
    %118 = arith.select %115, %116, %117 : vector<2x128xi1>, vector<2x128xf32>
    %cst_75 = arith.constant dense<0.000000e+00> : vector<128xf32>
    %119 = vector.multi_reduction <add>, %118, %cst_75 [0] : vector<2x128xf32> to vector<128xf32>
    %120 = vector.shape_cast %119 : vector<128xf32> to vector<1x128xf32>
    %121 = tpu.concatenate %97, %99, %104, %109, %114, %120, %84 in 0 : vector<1x128xf32>, vector<1x128xf32>, vector<1x128xf32>, vector<1x128xf32>, vector<1x128xf32>, vector<1x128xf32>, vector<2x128xf32> -> vector<8x128xf32>
    %c0_76 = arith.constant 0 : index
    %c0_77 = arith.constant 0 : index
    %c0_78 = arith.constant 0 : index
    %c0_79 = arith.constant 0 : index
    %122 = vector.load %arg5[%c0_76, %c0_77, %c0_78, %c0_79] : memref<1x1x32x128xf32, #tpu.memory_space<vmem>>, vector<1x1x8x128xf32>
    %123 = vector.shape_cast %122 : vector<1x1x8x128xf32> to vector<8x128xf32>
    %124 = arith.addf %123, %121 : vector<8x128xf32>
    %c0_80 = arith.constant 0 : index
    %c0_81 = arith.constant 0 : index
    %c0_82 = arith.constant 0 : index
    %c0_83 = arith.constant 0 : index
    %125 = vector.load %arg5[%c0_80, %c0_81, %c0_82, %c0_83] : memref<1x1x32x128xf32, #tpu.memory_space<vmem>>, vector<1x1x8x128xf32>
    %126 = vector.shape_cast %125 : vector<1x1x8x128xf32> to vector<8x128xf32>
    %127 = vector.shape_cast %124 : vector<8x128xf32> to vector<1x1x8x128xf32>
    tpu.vector_store %arg5[%c0_80, %c0_81, %c0_82, %c0_83], %127 {strides = array<i32>} : memref<1x1x32x128xf32, #tpu.memory_space<vmem>>, vector<1x1x8x128xf32>,
    %c1_84 = arith.constant 1 : index
    %c0_85 = arith.constant 0 : index
    %c0_86 = arith.constant 0 : index
    %128 = vector.load %arg6[%c1_84, %c0_85, %c0_86] : memref<4x2x128xf32, #tpu.memory_space<vmem>>, vector<1x2x128xf32>
    %129 = vector.shape_cast %128 : vector<1x2x128xf32> to vector<2x128xf32>
    %c1_87 = arith.constant 1 : index
    %c0_88 = arith.constant 0 : index
    %c0_89 = arith.constant 0 : index
    %130 = vector.load %arg7[%c1_87, %c0_88, %c0_89] : memref<4x2x128xf32, #tpu.memory_space<vmem>>, vector<1x2x128xf32>
    %131 = vector.shape_cast %130 : vector<1x2x128xf32> to vector<2x128xf32>
    %132 = arith.mulf %131, %81 : vector<2x128xf32>
    %c1_i32_90 = arith.constant 1 : i32
    %133 = vector.broadcast %c1_i32_90 : i32 to vector<2x128xi32>
    %134 = arith.cmpi eq, %9, %133 : vector<2x128xi32>
    %c1_i32_91 = arith.constant 1 : i32
    %135 = vector.broadcast %c1_i32_91 : i32 to vector<2x128xi32>
    %136 = arith.cmpi eq, %46, %135 : vector<2x128xi32>
    %cst_92 = arith.constant 0.000000e+00 : f32
    %137 = vector.broadcast %cst_92 : f32 to vector<2x128xf32>
    %138 = arith.select %134, %132, %137 : vector<2x128xi1>, vector<2x128xf32>
    %cst_93 = arith.constant dense<0.000000e+00> : vector<128xf32>
    %139 = vector.multi_reduction <add>, %138, %cst_93 [0] : vector<2x128xf32> to vector<128xf32>
    %140 = vector.shape_cast %139 : vector<128xf32> to vector<1x128xf32>
    %cst_94 = arith.constant dense<0.000000e+00> : vector<128xf32>
    %141 = vector.multi_reduction <add>, %132, %cst_94 [0] : vector<2x128xf32> to vector<128xf32>
    %142 = vector.shape_cast %141 : vector<128xf32> to vector<1x128xf32>
    %cst_95 = arith.constant 1.000000e+00 : f32
    %cst_96 = arith.constant 0.000000e+00 : f32
    %143 = vector.broadcast %cst_95 : f32 to vector<2x128xf32>
    %144 = vector.broadcast %cst_96 : f32 to vector<2x128xf32>
    %145 = arith.select %134, %143, %144 : vector<2x128xi1>, vector<2x128xf32>
    %cst_97 = arith.constant dense<0.000000e+00> : vector<128xf32>
    %146 = vector.multi_reduction <add>, %145, %cst_97 [0] : vector<2x128xf32> to vector<128xf32>
    %147 = vector.shape_cast %146 : vector<128xf32> to vector<1x128xf32>
    %148 = arith.subf %83, %129 : vector<2x128xf32>
    %cst_98 = arith.constant 0.000000e+00 : f32
    %149 = vector.broadcast %cst_98 : f32 to vector<2x128xf32>
    %150 = arith.select %134, %148, %149 : vector<2x128xi1>, vector<2x128xf32>
    %cst_99 = arith.constant dense<0.000000e+00> : vector<128xf32>
    %151 = vector.multi_reduction <add>, %150, %cst_99 [0] : vector<2x128xf32> to vector<128xf32>
    %152 = vector.shape_cast %151 : vector<128xf32> to vector<1x128xf32>
    %cst_100 = arith.constant 1.000000e+00 : f32
    %cst_101 = arith.constant 0.000000e+00 : f32
    %153 = vector.broadcast %cst_100 : f32 to vector<2x128xf32>
    %154 = vector.broadcast %cst_101 : f32 to vector<2x128xf32>
    %155 = arith.select %136, %153, %154 : vector<2x128xi1>, vector<2x128xf32>
    %cst_102 = arith.constant dense<0.000000e+00> : vector<128xf32>
    %156 = vector.multi_reduction <add>, %155, %cst_102 [0] : vector<2x128xf32> to vector<128xf32>
    %157 = vector.shape_cast %156 : vector<128xf32> to vector<1x128xf32>
    %158 = arith.andi %134, %136 : vector<2x128xi1>
    %cst_103 = arith.constant 1.000000e+00 : f32
    %cst_104 = arith.constant 0.000000e+00 : f32
    %159 = vector.broadcast %cst_103 : f32 to vector<2x128xf32>
    %160 = vector.broadcast %cst_104 : f32 to vector<2x128xf32>
    %161 = arith.select %158, %159, %160 : vector<2x128xi1>, vector<2x128xf32>
    %cst_105 = arith.constant dense<0.000000e+00> : vector<128xf32>
    %162 = vector.multi_reduction <add>, %161, %cst_105 [0] : vector<2x128xf32> to vector<128xf32>
    %163 = vector.shape_cast %162 : vector<128xf32> to vector<1x128xf32>
    %164 = tpu.concatenate %140, %142, %147, %152, %157, %163, %84 in 0 : vector<1x128xf32>, vector<1x128xf32>, vector<1x128xf32>, vector<1x128xf32>, vector<1x128xf32>, vector<1x128xf32>, vector<2x128xf32> -> vector<8x128xf32>
    %c0_106 = arith.constant 0 : index
    %c0_107 = arith.constant 0 : index
    %c8 = arith.constant 8 : index
    %c0_108 = arith.constant 0 : index
    %165 = vector.load %arg5[%c0_106, %c0_107, %c8, %c0_108] : memref<1x1x32x128xf32, #tpu.memory_space<vmem>>, vector<1x1x8x128xf32>
    %166 = vector.shape_cast %165 : vector<1x1x8x128xf32> to vector<8x128xf32>
    %167 = arith.addf %166, %164 : vector<8x128xf32>
    %c0_109 = arith.constant 0 : index
    %c0_110 = arith.constant 0 : index
    %c8_111 = arith.constant 8 : index
    %c0_112 = arith.constant 0 : index
    %168 = vector.load %arg5[%c0_109, %c0_110, %c8_111, %c0_112] : memref<1x1x32x128xf32, #tpu.memory_space<vmem>>, vector<1x1x8x128xf32>
    %169 = vector.shape_cast %168 : vector<1x1x8x128xf32> to vector<8x128xf32>
    %170 = vector.shape_cast %167 : vector<8x128xf32> to vector<1x1x8x128xf32>
    tpu.vector_store %arg5[%c0_109, %c0_110, %c8_111, %c0_112], %170 {strides = array<i32>} : memref<1x1x32x128xf32, #tpu.memory_space<vmem>>, vector<1x1x8x128xf32>,
    %c2_113 = arith.constant 2 : index
    %c0_114 = arith.constant 0 : index
    %c0_115 = arith.constant 0 : index
    %171 = vector.load %arg6[%c2_113, %c0_114, %c0_115] : memref<4x2x128xf32, #tpu.memory_space<vmem>>, vector<1x2x128xf32>
    %172 = vector.shape_cast %171 : vector<1x2x128xf32> to vector<2x128xf32>
    %c2_116 = arith.constant 2 : index
    %c0_117 = arith.constant 0 : index
    %c0_118 = arith.constant 0 : index
    %173 = vector.load %arg7[%c2_116, %c0_117, %c0_118] : memref<4x2x128xf32, #tpu.memory_space<vmem>>, vector<1x2x128xf32>
    %174 = vector.shape_cast %173 : vector<1x2x128xf32> to vector<2x128xf32>
    %175 = arith.mulf %174, %81 : vector<2x128xf32>
    %c2_i32_119 = arith.constant 2 : i32
    %176 = vector.broadcast %c2_i32_119 : i32 to vector<2x128xi32>
    %177 = arith.cmpi eq, %9, %176 : vector<2x128xi32>
    %c2_i32_120 = arith.constant 2 : i32
    %178 = vector.broadcast %c2_i32_120 : i32 to vector<2x128xi32>
    %179 = arith.cmpi eq, %46, %178 : vector<2x128xi32>
    %cst_121 = arith.constant 0.000000e+00 : f32
    %180 = vector.broadcast %cst_121 : f32 to vector<2x128xf32>
    %181 = arith.select %177, %175, %180 : vector<2x128xi1>, vector<2x128xf32>
    %cst_122 = arith.constant dense<0.000000e+00> : vector<128xf32>
    %182 = vector.multi_reduction <add>, %181, %cst_122 [0] : vector<2x128xf32> to vector<128xf32>
    %183 = vector.shape_cast %182 : vector<128xf32> to vector<1x128xf32>
    %cst_123 = arith.constant dense<0.000000e+00> : vector<128xf32>
    %184 = vector.multi_reduction <add>, %175, %cst_123 [0] : vector<2x128xf32> to vector<128xf32>
    %185 = vector.shape_cast %184 : vector<128xf32> to vector<1x128xf32>
    %cst_124 = arith.constant 1.000000e+00 : f32
    %cst_125 = arith.constant 0.000000e+00 : f32
    %186 = vector.broadcast %cst_124 : f32 to vector<2x128xf32>
    %187 = vector.broadcast %cst_125 : f32 to vector<2x128xf32>
    %188 = arith.select %177, %186, %187 : vector<2x128xi1>, vector<2x128xf32>
    %cst_126 = arith.constant dense<0.000000e+00> : vector<128xf32>
    %189 = vector.multi_reduction <add>, %188, %cst_126 [0] : vector<2x128xf32> to vector<128xf32>
    %190 = vector.shape_cast %189 : vector<128xf32> to vector<1x128xf32>
    %191 = arith.subf %83, %172 : vector<2x128xf32>
    %cst_127 = arith.constant 0.000000e+00 : f32
    %192 = vector.broadcast %cst_127 : f32 to vector<2x128xf32>
    %193 = arith.select %177, %191, %192 : vector<2x128xi1>, vector<2x128xf32>
    %cst_128 = arith.constant dense<0.000000e+00> : vector<128xf32>
    %194 = vector.multi_reduction <add>, %193, %cst_128 [0] : vector<2x128xf32> to vector<128xf32>
    %195 = vector.shape_cast %194 : vector<128xf32> to vector<1x128xf32>
    %cst_129 = arith.constant 1.000000e+00 : f32
    %cst_130 = arith.constant 0.000000e+00 : f32
    %196 = vector.broadcast %cst_129 : f32 to vector<2x128xf32>
    %197 = vector.broadcast %cst_130 : f32 to vector<2x128xf32>
    %198 = arith.select %179, %196, %197 : vector<2x128xi1>, vector<2x128xf32>
    %cst_131 = arith.constant dense<0.000000e+00> : vector<128xf32>
    %199 = vector.multi_reduction <add>, %198, %cst_131 [0] : vector<2x128xf32> to vector<128xf32>
    %200 = vector.shape_cast %199 : vector<128xf32> to vector<1x128xf32>
    %201 = arith.andi %177, %179 : vector<2x128xi1>
    %cst_132 = arith.constant 1.000000e+00 : f32
    %cst_133 = arith.constant 0.000000e+00 : f32
    %202 = vector.broadcast %cst_132 : f32 to vector<2x128xf32>
    %203 = vector.broadcast %cst_133 : f32 to vector<2x128xf32>
    %204 = arith.select %201, %202, %203 : vector<2x128xi1>, vector<2x128xf32>
    %cst_134 = arith.constant dense<0.000000e+00> : vector<128xf32>
    %205 = vector.multi_reduction <add>, %204, %cst_134 [0] : vector<2x128xf32> to vector<128xf32>
    %206 = vector.shape_cast %205 : vector<128xf32> to vector<1x128xf32>
    %207 = tpu.concatenate %183, %185, %190, %195, %200, %206, %84 in 0 : vector<1x128xf32>, vector<1x128xf32>, vector<1x128xf32>, vector<1x128xf32>, vector<1x128xf32>, vector<1x128xf32>, vector<2x128xf32> -> vector<8x128xf32>
    %c0_135 = arith.constant 0 : index
    %c0_136 = arith.constant 0 : index
    %c16 = arith.constant 16 : index
    %c0_137 = arith.constant 0 : index
    %208 = vector.load %arg5[%c0_135, %c0_136, %c16, %c0_137] : memref<1x1x32x128xf32, #tpu.memory_space<vmem>>, vector<1x1x8x128xf32>
    %209 = vector.shape_cast %208 : vector<1x1x8x128xf32> to vector<8x128xf32>
    %210 = arith.addf %209, %207 : vector<8x128xf32>
    %c0_138 = arith.constant 0 : index
    %c0_139 = arith.constant 0 : index
    %c16_140 = arith.constant 16 : index
    %c0_141 = arith.constant 0 : index
    %211 = vector.load %arg5[%c0_138, %c0_139, %c16_140, %c0_141] : memref<1x1x32x128xf32, #tpu.memory_space<vmem>>, vector<1x1x8x128xf32>
    %212 = vector.shape_cast %211 : vector<1x1x8x128xf32> to vector<8x128xf32>
    %213 = vector.shape_cast %210 : vector<8x128xf32> to vector<1x1x8x128xf32>
    tpu.vector_store %arg5[%c0_138, %c0_139, %c16_140, %c0_141], %213 {strides = array<i32>} : memref<1x1x32x128xf32, #tpu.memory_space<vmem>>, vector<1x1x8x128xf32>,
    %c3_142 = arith.constant 3 : index
    %c0_143 = arith.constant 0 : index
    %c0_144 = arith.constant 0 : index
    %214 = vector.load %arg6[%c3_142, %c0_143, %c0_144] : memref<4x2x128xf32, #tpu.memory_space<vmem>>, vector<1x2x128xf32>
    %215 = vector.shape_cast %214 : vector<1x2x128xf32> to vector<2x128xf32>
    %c3_145 = arith.constant 3 : index
    %c0_146 = arith.constant 0 : index
    %c0_147 = arith.constant 0 : index
    %216 = vector.load %arg7[%c3_145, %c0_146, %c0_147] : memref<4x2x128xf32, #tpu.memory_space<vmem>>, vector<1x2x128xf32>
    %217 = vector.shape_cast %216 : vector<1x2x128xf32> to vector<2x128xf32>
    %218 = arith.mulf %217, %81 : vector<2x128xf32>
    %c3_i32_148 = arith.constant 3 : i32
    %219 = vector.broadcast %c3_i32_148 : i32 to vector<2x128xi32>
    %220 = arith.cmpi eq, %9, %219 : vector<2x128xi32>
    %c3_i32_149 = arith.constant 3 : i32
    %221 = vector.broadcast %c3_i32_149 : i32 to vector<2x128xi32>
    %222 = arith.cmpi eq, %46, %221 : vector<2x128xi32>
    %cst_150 = arith.constant 0.000000e+00 : f32
    %223 = vector.broadcast %cst_150 : f32 to vector<2x128xf32>
    %224 = arith.select %220, %218, %223 : vector<2x128xi1>, vector<2x128xf32>
    %cst_151 = arith.constant dense<0.000000e+00> : vector<128xf32>
    %225 = vector.multi_reduction <add>, %224, %cst_151 [0] : vector<2x128xf32> to vector<128xf32>
    %226 = vector.shape_cast %225 : vector<128xf32> to vector<1x128xf32>
    %cst_152 = arith.constant dense<0.000000e+00> : vector<128xf32>
    %227 = vector.multi_reduction <add>, %218, %cst_152 [0] : vector<2x128xf32> to vector<128xf32>
    %228 = vector.shape_cast %227 : vector<128xf32> to vector<1x128xf32>
    %cst_153 = arith.constant 1.000000e+00 : f32
    %cst_154 = arith.constant 0.000000e+00 : f32
    %229 = vector.broadcast %cst_153 : f32 to vector<2x128xf32>
    %230 = vector.broadcast %cst_154 : f32 to vector<2x128xf32>
    %231 = arith.select %220, %229, %230 : vector<2x128xi1>, vector<2x128xf32>
    %cst_155 = arith.constant dense<0.000000e+00> : vector<128xf32>
    %232 = vector.multi_reduction <add>, %231, %cst_155 [0] : vector<2x128xf32> to vector<128xf32>
    %233 = vector.shape_cast %232 : vector<128xf32> to vector<1x128xf32>
    %234 = arith.subf %83, %215 : vector<2x128xf32>
    %cst_156 = arith.constant 0.000000e+00 : f32
    %235 = vector.broadcast %cst_156 : f32 to vector<2x128xf32>
    %236 = arith.select %220, %234, %235 : vector<2x128xi1>, vector<2x128xf32>
    %cst_157 = arith.constant dense<0.000000e+00> : vector<128xf32>
    %237 = vector.multi_reduction <add>, %236, %cst_157 [0] : vector<2x128xf32> to vector<128xf32>
    %238 = vector.shape_cast %237 : vector<128xf32> to vector<1x128xf32>
    %cst_158 = arith.constant 1.000000e+00 : f32
    %cst_159 = arith.constant 0.000000e+00 : f32
    %239 = vector.broadcast %cst_158 : f32 to vector<2x128xf32>
    %240 = vector.broadcast %cst_159 : f32 to vector<2x128xf32>
    %241 = arith.select %222, %239, %240 : vector<2x128xi1>, vector<2x128xf32>
    %cst_160 = arith.constant dense<0.000000e+00> : vector<128xf32>
    %242 = vector.multi_reduction <add>, %241, %cst_160 [0] : vector<2x128xf32> to vector<128xf32>
    %243 = vector.shape_cast %242 : vector<128xf32> to vector<1x128xf32>
    %244 = arith.andi %220, %222 : vector<2x128xi1>
    %cst_161 = arith.constant 1.000000e+00 : f32
    %cst_162 = arith.constant 0.000000e+00 : f32
    %245 = vector.broadcast %cst_161 : f32 to vector<2x128xf32>
    %246 = vector.broadcast %cst_162 : f32 to vector<2x128xf32>
    %247 = arith.select %244, %245, %246 : vector<2x128xi1>, vector<2x128xf32>
    %cst_163 = arith.constant dense<0.000000e+00> : vector<128xf32>
    %248 = vector.multi_reduction <add>, %247, %cst_163 [0] : vector<2x128xf32> to vector<128xf32>
    %249 = vector.shape_cast %248 : vector<128xf32> to vector<1x128xf32>
    %250 = tpu.concatenate %226, %228, %233, %238, %243, %249, %84 in 0 : vector<1x128xf32>, vector<1x128xf32>, vector<1x128xf32>, vector<1x128xf32>, vector<1x128xf32>, vector<1x128xf32>, vector<2x128xf32> -> vector<8x128xf32>
    %c0_164 = arith.constant 0 : index
    %c0_165 = arith.constant 0 : index
    %c24 = arith.constant 24 : index
    %c0_166 = arith.constant 0 : index
    %251 = vector.load %arg5[%c0_164, %c0_165, %c24, %c0_166] : memref<1x1x32x128xf32, #tpu.memory_space<vmem>>, vector<1x1x8x128xf32>
    %252 = vector.shape_cast %251 : vector<1x1x8x128xf32> to vector<8x128xf32>
    %253 = arith.addf %252, %250 : vector<8x128xf32>
    %c0_167 = arith.constant 0 : index
    %c0_168 = arith.constant 0 : index
    %c24_169 = arith.constant 24 : index
    %c0_170 = arith.constant 0 : index
    %254 = vector.load %arg5[%c0_167, %c0_168, %c24_169, %c0_170] : memref<1x1x32x128xf32, #tpu.memory_space<vmem>>, vector<1x1x8x128xf32>
    %255 = vector.shape_cast %254 : vector<1x1x8x128xf32> to vector<8x128xf32>
    %256 = vector.shape_cast %253 : vector<8x128xf32> to vector<1x1x8x128xf32>
    tpu.vector_store %arg5[%c0_167, %c0_168, %c24_169, %c0_170], %256 {strides = array<i32>} : memref<1x1x32x128xf32, #tpu.memory_space<vmem>>, vector<1x1x8x128xf32>,
    %c1_i32_171 = arith.constant 1 : i32
    return
  }
  func.func @transform_0(%arg0: i32, %arg1: i32, %arg2: i32) -> (i32, i32, i32, i32) {
    %c1_i32 = arith.constant 1 : i32
    %0 = arith.muli %arg0, %c1_i32 : i32
    %1 = arith.addi %0, %arg2 : i32
    %c0_i32 = arith.constant 0 : i32
    %c0_i32_0 = arith.constant 0 : i32
    %c0_i32_1 = arith.constant 0 : i32
    return %arg1, %c0_i32, %1, %c0_i32_0 : i32, i32, i32, i32
  }
  func.func @transform_1(%arg0: i32, %arg1: i32, %arg2: i32) -> (i32, i32, i32) {
    %c1_i32 = arith.constant 1 : i32
    %0 = arith.muli %arg0, %c1_i32 : i32
    %1 = arith.addi %0, %arg2 : i32
    %c0_i32 = arith.constant 0 : i32
    %c0_i32_0 = arith.constant 0 : i32
    return %arg1, %1, %c0_i32 : i32, i32, i32
  }
  func.func @transform_2(%arg0: i32, %arg1: i32, %arg2: i32) -> (i32, i32, i32, i32) {
    %c0_i32 = arith.constant 0 : i32
    %c0_i32_0 = arith.constant 0 : i32
    %c0_i32_1 = arith.constant 0 : i32
    return %arg0, %arg1, %c0_i32, %c0_i32_0 : i32, i32, i32, i32
  }
}

</mosaic_0001>

<llo_original>
// kernel: squeeze.12
$region0: #{squeeze.12}
  %s0 = inlined_call_operand.vmem [shape: f32[4,128], index: 0, kind: input, shape index: {}]
  %s1 = inlined_call_operand.vmem [shape: f32[4,8,16], index: 1, kind: output, shape index: {}]
  $region1: #{squeeze.12} parent=0
    #allocation0 [shape = 'u8[4096]{0}', space=vmem, size = 0x1000, scoped, tag = 'scoped mem for input reshape']
    %s3 = sshllo.u32 0, 4
    %v4 = vld [vmem:[%s0] sm:%s3]
    %5 = vst [vmem:[#allocation0] sm:%s3] %v4
    %v6 = vld [vmem:[#allocation0] sm:$0xf]
    %vm7 = vcmask 130048
    %8 = vst.msk [vmem:[%s1] ss:$8 sm:$0xf] %vm7, %v6
    %v9 = vld [vmem:[#allocation0] sm:$0xf]
    %10 = vrot.lane.b32.xlu0 %v9, 112
    %v11 = vpop.permute.xlu0 %10
    %vm12 = vcmask 130048
    %s13 = scalar_lea.vmem %s1, 1
    %14 = vst.msk [vmem:[%s13] ss:$8 sm:$0xf] %vm12, %v11
    %v15 = vld [vmem:[#allocation0] sm:$0xf]
    %16 = vrot.lane.b32.xlu0 %v15, 96
    %v17 = vpop.permute.xlu0 %16
    %vm18 = vcmask 130048
    %s19 = scalar_lea.vmem %s1, 2
    %20 = vst.msk [vmem:[%s19] ss:$8 sm:$0xf] %vm18, %v17
    %v21 = vld [vmem:[#allocation0] sm:$0xf]
    %22 = vrot.lane.b32.xlu0 %v21, 80
    %v23 = vpop.permute.xlu0 %22
    %vm24 = vcmask 130048
    %s25 = scalar_lea.vmem %s1, 3
    %26 = vst.msk [vmem:[%s25] ss:$8 sm:$0xf] %vm24, %v23
    %v27 = vld [vmem:[#allocation0] sm:$0xf]
    %28 = vrot.lane.b32.xlu0 %v27, 64
    %v29 = vpop.permute.xlu0 %28
    %vm30 = vcmask 130048
    %s31 = scalar_lea.vmem %s1, 4
    %32 = vst.msk [vmem:[%s31] ss:$8 sm:$0xf] %vm30, %v29
    %v33 = vld [vmem:[#allocation0] sm:$0xf]
    %34 = vrot.lane.b32.xlu0 %v33, 48
    %v35 = vpop.permute.xlu0 %34
    %vm36 = vcmask 130048
    %s37 = scalar_lea.vmem %s1, 5
    %38 = vst.msk [vmem:[%s37] ss:$8 sm:$0xf] %vm36, %v35
    %v39 = vld [vmem:[#allocation0] sm:$0xf]
    %40 = vrot.lane.b32.xlu0 %v39, 32
    %v41 = vpop.permute.xlu0 %40
    %vm42 = vcmask 130048
    %s43 = scalar_lea.vmem %s1, 6
    %44 = vst.msk [vmem:[%s43] ss:$8 sm:$0xf] %vm42, %v41
    %v45 = vld [vmem:[#allocation0] sm:$0xf]
    %46 = vrot.lane.b32.xlu0 %v45, 16
    %v47 = vpop.permute.xlu0 %46
    %vm48 = vcmask 130048
    %s49 = scalar_lea.vmem %s1, 7
    %50 = vst.msk [vmem:[%s49] ss:$8 sm:$0xf] %vm48, %v47

// kernel: _loss_impl.1
$region0: #{_loss_impl.1}
  #allocation0 [shape = 'u32[]', space=smem, size = 0x4, offset = 0x4, fixed_abs, tag = 'smem constant byte address 0x4 - core index']
  #allocation1 [shape = 'u32[144,128]{1,0:T(1,128)}', space=vmem, size = 0x12000, scoped, tag = 'internal scratch']
  #allocation2 [shape = 'f32[4,2,128]{2,1,0:T(2,128)}', space=vmem, size = 0x1000, scoped, tag = 'scratch operand']
  #allocation3 [shape = 'f32[4,2,128]{2,1,0:T(2,128)}', space=vmem, size = 0x1000, scoped, tag = 'scratch operand']
  %s0 = inlined_call_operand.vmem [shape: f32[2,4,2,128], index: 0, kind: input, shape index: {}]
  %s1 = inlined_call_operand.vmem [shape: s32[2,2,128], index: 1, kind: input, shape index: {}]
  %s2 = inlined_call_operand.vmem [shape: f32[1,2,32,128], index: 2, kind: output, shape index: {}]
  %s3 = sld [smem:[#allocation0]]
  $region45: #{_loss_impl.1} parent=0
    _
  %s5 = ssub.s32 1, %s3
  %s6 = scalar_select 0, %s5, %s3
  loop: start=0, step=1, limit=4
  $region2: #{_loss_impl.1} parent=0 // loop_pre_header
    _
  $region3: #{_loss_impl.1} parent=0 // loop_header
    %s8 = sphi 0, %s12
    %p9 = scmp.ge.s32.totalorder %s8, 4
    %s15 = sphi 0, %s34
    %s16 = sphi 0, %s30
    %s17 = sphi 0, %s26
    %s18 = sphi 0, %s15
    %s19 = sphi 0, %s16
    %s20 = sphi 0, %s17
    %s21 = sphi 0, %s18
    %s22 = sphi 0, %s19
    %s23 = sphi 0, %s20
    %s41 = sphi 0, %s43
    %s44 = sphi 0, %s41
    %s45 = sphi 0, %s44
    %s61 = sphi 0, %s45
    %s71 = sphi 0, %s73
    %s74 = sphi 0, %s71
    %s75 = sphi 0, %s74
    %s91 = sphi 0, %s75
    %s99 = sphi 0, %s101
    %s102 = sphi 0, %s99
    %s103 = sphi 0, %s102
    %s119 = sphi 0, %s103
  $region4: #{_loss_impl.1} parent=0 // loop_header_branch
    %11 = sbr.rel (%p9) target = $region8
  $region5: #{_loss_impl.1} parent=0 // loop_body
    %s13 = ssub.s32 %s8, 1
    %s14 = ssub.s32 %s8, 2
    %s24 = sadd.s32 1, %s17
    %p25 = scmp.ge.s32.totalorder %s24, 1
    %s26 = scalar_select %p25, 0, %s24
    %s27 = sadd.s32 1, %s16
    %s28 = scalar_select %p25, %s27, %s16
    %p29 = scmp.ge.s32.totalorder %s28, 2
    %s30 = scalar_select %p29, 0, %s28
    %s31 = sadd.s32 1, %s15
    %s32 = scalar_select %p29, %s31, %s15
    %p33 = scmp.ge.s32.totalorder %s32, 1
    %s34 = scalar_select %p33, 0, %s32
    %s35 = sadd.s32 %s15, %s17
    %s36 = sadd.s32 %s34, %s26
    %s37 = ssub.s32 %s16, %s30
    %s38 = ssub.s32 %s35, %s36
    %s39 = sor.u32 %s37, %s38
    %p40 = scmp.eq.s32.totalorder %s39, 0
    %s42 = sadd.s32 %s41, 1
    %s43 = scalar_select %p40, %s41, %s42
    %p46 = pneg %p40
    %p47 = scmp.eq.s32.totalorder %s8, 1
    %p48 = por %p46, %p47
    %p49 = scmp.ne.s32.totalorder %s41, %s44
    %p50 = scmp.eq.s32.totalorder %s8, 0
    %p51 = por %p49, %p50
    %p52 = scmp.ne.s32.totalorder %s41, %s44
    %p53 = scmp.eq.s32.totalorder %s13, 1
    %p54 = por %p52, %p53
    %p55 = scmp.ne.s32.totalorder %s44, %s45
    %p56 = scmp.eq.s32.totalorder %s13, 0
    %p57 = por %p55, %p56
    %p58 = scmp.ne.s32.totalorder %s44, %s45
    %p59 = scmp.eq.s32.totalorder %s14, 1
    %p60 = por %p58, %p59
    %p62 = scmp.ne.s32.totalorder %s45, %s61
    %p63 = scmp.eq.s32.totalorder %s14, 0
    %p64 = por %p62, %p63
    %s65 = sadd.s32 %s15, %s17
    %s66 = sadd.s32 %s34, %s26
    %s67 = ssub.s32 %s16, %s30
    %s68 = ssub.s32 %s65, %s66
    %s69 = sor.u32 %s67, %s68
    %p70 = scmp.eq.s32.totalorder %s69, 0
    %s72 = sadd.s32 %s71, 1
    %s73 = scalar_select %p70, %s71, %s72
    %p76 = pneg %p70
    %p77 = scmp.eq.s32.totalorder %s8, 1
    %p78 = por %p76, %p77
    %p79 = scmp.ne.s32.totalorder %s71, %s74
    %p80 = scmp.eq.s32.totalorder %s8, 0
    %p81 = por %p79, %p80
    %p82 = scmp.ne.s32.totalorder %s71, %s74
    %p83 = scmp.eq.s32.totalorder %s13, 1
    %p84 = por %p82, %p83
    %p85 = scmp.ne.s32.totalorder %s74, %s75
    %p86 = scmp.eq.s32.totalorder %s13, 0
    %p87 = por %p85, %p86
    %p88 = scmp.ne.s32.totalorder %s74, %s75
    %p89 = scmp.eq.s32.totalorder %s14, 1
    %p90 = por %p88, %p89
    %p92 = scmp.ne.s32.totalorder %s75, %s91
    %p93 = scmp.eq.s32.totalorder %s14, 0
    %p94 = por %p92, %p93
    %s95 = ssub.s32 %s15, %s34
    %s96 = ssub.s32 %s16, %s30
    %s97 = sor.u32 %s95, %s96
    %p98 = scmp.eq.s32.totalorder %s97, 0
    %s100 = sadd.s32 %s99, 1
    %s101 = scalar_select %p98, %s99, %s100
    %p104 = pneg %p98
    %p105 = scmp.eq.s32.totalorder %s8, 1
    %p106 = por %p104, %p105
    %p107 = scmp.ne.s32.totalorder %s99, %s102
    %p108 = scmp.eq.s32.totalorder %s8, 0
    %p109 = por %p107, %p108
    %p110 = scmp.ne.s32.totalorder %s99, %s102
    %p111 = scmp.eq.s32.totalorder %s13, 1
    %p112 = por %p110, %p111
    %p113 = scmp.ne.s32.totalorder %s102, %s103
    %p114 = scmp.eq.s32.totalorder %s13, 0
    %p115 = por %p113, %p114
    %p116 = scmp.ne.s32.totalorder %s102, %s103
    %p117 = scmp.eq.s32.totalorder %s14, 1
    %p118 = por %p116, %p117
    %p120 = scmp.ne.s32.totalorder %s103, %s119
    %p121 = scmp.eq.s32.totalorder %s14, 0
    %p122 = por %p120, %p121
    %p123 = scmp.le.s32.totalorder 1, %s8
    %p124 = scmp.lt.s32.totalorder %s8, 3
    %p125 = pnand %p123, %p124
    %p126 = pneg %p125
    // Predicated region
    $region9: #{_loss_impl.1} parent=5 // pred_check
      _
    $region10: #{_loss_impl.1} parent=5 // pred_check_branch
      %128 = sbr.rel (%p125) target = $region12
    $region11: #{_loss_impl.1} parent=5 // pred_region
      %s129 = ssub.s32 %s8, 1
    $region12: #{_loss_impl.1} parent=5 // pred_fallthru
      _
    %p130 = scmp.lt.s32.totalorder %s8, 2
    // Predicated region
    $region13: #{_loss_impl.1} parent=5 // pred_check
      %p131 = pneg %p130
    $region14: #{_loss_impl.1} parent=5 // pred_check_branch
      %133 = sbr.rel (%p131) target = $region16
    $region15: #{_loss_impl.1} parent=5 // pred_region
      // Predicated region
      $region17: #{_loss_impl.1} parent=15 // pred_check
        %p134 = pneg %p51
      $region18: #{_loss_impl.1} parent=15 // pred_check_branch
        %136 = sbr.rel (%p134) target = $region20
      $region19: #{_loss_impl.1} parent=15 // pred_region
        %s137 = sadd.s32 %s15, %s17
        %p138 = scmp.lt.s32.totalorder %s16, 1
        %s139 = scalar_select %p138, %s16, 1
        %p140 = scmp.lt.s32.totalorder %s137, 0
        %s141 = scalar_select %p140, %s137, 0
        %s142 = smul.addr %s139, 4
        %s143 = sadd.s32 %s141, %s142
        %s144 = smul.addr %s143, 2
        %s145 = scalar_lea.vmem %s0, %s144
        %s146 = sadd.s32 %s15, %s17
      $region20: #{_loss_impl.1} parent=15 // pred_fallthru
        _
      // Predicated region
      $region21: #{_loss_impl.1} parent=15 // pred_check
        %p147 = pneg %p81
      $region22: #{_loss_impl.1} parent=15 // pred_check_branch
        %149 = sbr.rel (%p147) target = $region24
      $region23: #{_loss_impl.1} parent=15 // pred_region
        %s150 = sadd.s32 %s15, %s17
        %p151 = scmp.lt.s32.totalorder %s16, 1
        %s152 = scalar_select %p151, %s16, 1
        %p153 = scmp.lt.s32.totalorder %s150, 0
        %s154 = scalar_select %p153, %s150, 0
        %s155 = sadd.s32 %s154, %s152
        %s156 = smul.addr %s155, 2
        %s157 = scalar_lea.vmem %s1, %s156
        %s158 = sadd.s32 %s15, %s17
      $region24: #{_loss_impl.1} parent=15 // pred_fallthru
        _
    $region16: #{_loss_impl.1} parent=5 // pred_fallthru
      _
    %p159 = scmp.le.s32.totalorder 1, %s8
    %p160 = scmp.lt.s32.totalorder %s8, 3
    %p161 = pnand %p159, %p160
    %p162 = pneg %p161
    // Predicated region
    $region25: #{_loss_impl.1} parent=5 // pred_check
      _
    $region26: #{_loss_impl.1} parent=5 // pred_check_branch
      %164 = sbr.rel (%p161) target = $region28
    $region27: #{_loss_impl.1} parent=5 // pred_region
      %s165 = ssub.s32 %s8, 1
      %s166 = sadd.s32 %s18, %s20
      %p167 = scmp.lt.s32.totalorder %s19, 1
      %s168 = scalar_select %p167, %s19, 1
      %p169 = scmp.lt.s32.totalorder %s166, 0
      %s170 = scalar_select %p169, %s166, 0
      %s171 = smul.addr %s168, 4
      %s172 = sadd.s32 %s170, %s171
      %s173 = smul.addr %s172, 2
      %s174 = scalar_lea.vmem %s0, %s173
      %p175 = pneg %p57
      %p176 = pneg %p54
      %s177 = sadd.s32 %s18, %s20
      %p178 = scmp.lt.s32.totalorder %s19, 1
      %s179 = scalar_select %p178, %s19, 1
      %p180 = scmp.lt.s32.totalorder %s177, 0
      %s181 = scalar_select %p180, %s177, 0
      %s182 = sadd.s32 %s181, %s179
      %s183 = smul.addr %s182, 2
      %s184 = scalar_lea.vmem %s1, %s183
      %p185 = pneg %p87
      %p186 = pneg %p84
      %p187 = pneg %p115
      %p188 = pneg %p112
      %p189 = scmp.lt.s32.totalorder %s18, 0
      %s190 = scalar_select %p189, %s18, 0
      %p191 = scmp.lt.s32.totalorder %s19, 1
      %s192 = scalar_select %p191, %s19, 1
      %s193 = smul.addr %s192, 4
      %s194 = smul.addr %s190, 8
      %s195 = sadd.s32 %s193, %s194
      %s196 = smul.addr %s195, 8
      %s197 = scalar_lea.vmem %s2, %s196
      %s198 = sadd.s32 %s18, %s20
      %p199 = scmp.lt.s32.totalorder %s19, 1
      %s200 = scalar_select %p199, %s19, 1
      %p201 = scmp.lt.s32.totalorder %s198, 0
      %s202 = scalar_select %p201, %s198, 0
      %s203 = smul.addr %s200, 4
      %s204 = sadd.s32 %s202, %s203
      %s205 = smul.addr %s204, 2
      %s206 = scalar_lea.vmem %s0, %s205
      %s207 = sadd.s32 %s18, %s20
      %s208 = sadd.s32 %s18, %s20
      %p209 = scmp.lt.s32.totalorder %s19, 1
      %s210 = scalar_select %p209, %s19, 1
      %p211 = scmp.lt.s32.totalorder %s208, 0
      %s212 = scalar_select %p211, %s208, 0
      %s213 = sadd.s32 %s212, %s210
      %s214 = smul.addr %s213, 2
      %s215 = scalar_lea.vmem %s1, %s214
      %s216 = sadd.s32 %s18, %s20
      %p217 = scmp.lt.s32.totalorder %s18, 0
      %s218 = scalar_select %p217, %s18, 0
      %p219 = scmp.lt.s32.totalorder %s19, 1
      %s220 = scalar_select %p219, %s19, 1
      %s221 = smul.addr %s220, 4
      %s222 = smul.addr %s218, 8
      %s223 = sadd.s32 %s221, %s222
      %s224 = smul.addr %s223, 8
      %s225 = scalar_lea.vmem %s2, %s224
      %p226 = scmp.eq.s32.totalorder %s20, 0
      // Predicated region
      $region29: #{_loss_impl.1} parent=27 // pred_check
        %p227 = pneg %p226
      $region30: #{_loss_impl.1} parent=27 // pred_check_branch
        %229 = sbr.rel (%p227) target = $region32
      $region31: #{_loss_impl.1} parent=27 // pred_region
        %230 = vst [vmem:[%s225] sm:$0xff] 0.0
        %231 = vst [vmem:[%s225 + $0x8] sm:$0xff] 0.0
        %232 = vst [vmem:[%s225 + $0x10] sm:$0xff] 0.0
        %233 = vst [vmem:[%s225 + $0x18] sm:$0xff] 0.0
      $region32: #{_loss_impl.1} parent=27 // pred_fallthru
        _
      %v234 = vld [vmem:[%s215] sm:$0x3]
      %v235 = vld [vmem:[%s206] sm:$0x3]
      %236 = vst [vmem:[#allocation2] sm:$0x3] %v235
      %s237 = sadd.s32 0, 2
      %s238 = scalar_lea.vmem %s206, %s237
      %v239 = vld [vmem:[%s238] sm:$0x3]
      %s240 = scalar_lea.vmem [#allocation2], 2
      %241 = vst [vmem:[%s240] sm:$0x3] %v239
      %vm242 = vcmp.gt.f32.partialorder %v239, %v235
      %v243 = vsel %vm242, %v239, %v235
      %v244 = vsel %vm242, 1, 0
      %s245 = sadd.s32 0, 4
      %s246 = scalar_lea.vmem %s206, %s245
      %v247 = vld [vmem:[%s246] sm:$0x3]
      %s248 = scalar_lea.vmem [#allocation2], 4
      %249 = vst [vmem:[%s248] sm:$0x3] %v247
      %vm250 = vcmp.gt.f32.partialorder %v247, %v243
      %v251 = vsel %vm250, %v247, %v243
      %v252 = vsel %vm250, 2, %v244
      %s253 = sadd.s32 0, 6
      %s254 = scalar_lea.vmem %s206, %s253
      %v255 = vld [vmem:[%s254] sm:$0x3]
      %s256 = scalar_lea.vmem [#allocation2], 6
      %257 = vst [vmem:[%s256] sm:$0x3] %v255
      %vm258 = vcmp.gt.f32.partialorder %v255, %v251
      %v259 = vsel %vm258, %v255, %v251
      %v260 = vsel %vm258, 3, %v252
      %v261 = vld [vmem:[#allocation2] sm:$0x3]
      %v262 = vsub.f32 %v261, %v259
      %v263 = vmul.f32 %v262, 1.442695
      %v264 = vpow.pop %v263
      %265 = vst [vmem:[#allocation3] sm:$0x3] %v264
      %v266 = vadd.f32 %v264, 0.0
      %v267 = vld [vmem:[%s240] sm:$0x3]
      %v268 = vsub.f32 %v267, %v259
      %v269 = vmul.f32 %v268, 1.442695
      %v270 = vpow.pop %v269
      %s271 = scalar_lea.vmem [#allocation3], 2
      %272 = vst [vmem:[%s271] sm:$0x3] %v270
      %v273 = vadd.f32 %v266, %v270
      %v274 = vld [vmem:[%s248] sm:$0x3]
      %v275 = vsub.f32 %v274, %v259
      %v276 = vmul.f32 %v275, 1.442695
      %v277 = vpow.pop %v276
      %s278 = scalar_lea.vmem [#allocation3], 4
      %279 = vst [vmem:[%s278] sm:$0x3] %v277
      %v280 = vadd.f32 %v273, %v277
      %v281 = vld [vmem:[%s256] sm:$0x3]
      %v282 = vsub.f32 %v281, %v259
      %v283 = vmul.f32 %v282, 1.442695
      %v284 = vpow.pop %v283
      %s285 = scalar_lea.vmem [#allocation3], 6
      %286 = vst [vmem:[%s285] sm:$0x3] %v284
      %v287 = vadd.f32 %v280, %v284
      %v288 = vrcp.pop %v287
      %v289 = vmul.f32 1.0, %v288
      %v290 = vlog2.pop %v287
      %v291 = vmul.f32 %v290, 0.6931472
      %v292 = vadd.f32 %v259, %v291
      %v293 = vld [vmem:[#allocation2] sm:$0x3]
      %v294 = vld [vmem:[#allocation3] sm:$0x3]
      %v295 = vmul.f32 %v294, %v289
      %vm296 = vcmp.eq.s32.totalorder %v234, 0
      %vm297 = vcmp.eq.s32.totalorder %v260, 0
      %v298 = vsel %vm296, %v295, 0.0
      %vm299 = vcmask 1041408
      %v300 = vsel %vm299, %v298, 0.0
      %v301 = vrot.slane %v300, 4
      %v302 = vadd.f32 %v300, %v301
      %v303 = vrot.slane %v302, 2
      %v304 = vadd.f32 %v302, %v303
      %v305 = vrot.slane %v304, 1
      %v306 = vadd.f32 %v304, %v305
      %v307 = vsel %vm299, %v295, 0.0
      %v308 = vrot.slane %v307, 4
      %v309 = vadd.f32 %v307, %v308
      %v310 = vrot.slane %v309, 2
      %v311 = vadd.f32 %v309, %v310
      %v312 = vrot.slane %v311, 1
      %v313 = vadd.f32 %v311, %v312
      %v314 = vsel %vm296, 1.0, 0.0
      %v315 = vsel %vm299, %v314, 0.0
      %v316 = vrot.slane %v315, 4
      %v317 = vadd.f32 %v315, %v316
      %v318 = vrot.slane %v317, 2
      %v319 = vadd.f32 %v317, %v318
      %v320 = vrot.slane %v319, 1
      %v321 = vadd.f32 %v319, %v320
      %v322 = vsub.f32 %v292, %v293
      %v323 = vsel %vm296, %v322, 0.0
      %v324 = vsel %vm299, %v323, 0.0
      %v325 = vrot.slane %v324, 4
      %v326 = vadd.f32 %v324, %v325
      %v327 = vrot.slane %v326, 2
      %v328 = vadd.f32 %v326, %v327
      %v329 = vrot.slane %v328, 1
      %v330 = vadd.f32 %v328, %v329
      %v331 = vsel %vm297, 1.0, 0.0
      %v332 = vsel %vm299, %v331, 0.0
      %v333 = vrot.slane %v332, 4
      %v334 = vadd.f32 %v332, %v333
      %v335 = vrot.slane %v334, 2
      %v336 = vadd.f32 %v334, %v335
      %v337 = vrot.slane %v336, 1
      %v338 = vadd.f32 %v336, %v337
      %vm339 = vmand %vm296, %vm297
      %v340 = vsel %vm339, 1.0, 0.0
      %v341 = vsel %vm299, %v340, 0.0
      %v342 = vrot.slane %v341, 4
      %v343 = vadd.f32 %v341, %v342
      %v344 = vrot.slane %v343, 2
      %v345 = vadd.f32 %v343, %v344
      %v346 = vrot.slane %v345, 1
      %v347 = vadd.f32 %v345, %v346
      %vm348 = vcmask 1040384
      %v349 = vsel %vm348, %v306, %v313
      %v350 = vsel %vm299, %v349, %v321
      %vm351 = vcmask 1042432
      %v352 = vsel %vm351, %v350, %v330
      %vm353 = vcmask 1043456
      %v354 = vsel %vm353, %v352, %v338
      %vm355 = vcmask 1044480
      %v356 = vsel %vm355, %v354, %v347
      %vm357 = vcmask 1045504
      %v358 = vsel %vm357, %v356, 0.0
      %v359 = vld [vmem:[%s225] sm:$0xff]
      %v360 = vadd.f32 %v359, %v358
      %361 = vst [vmem:[%s225] sm:$0xff] %v360
      %v362 = vld [vmem:[%s240] sm:$0x3]
      %v363 = vld [vmem:[%s271] sm:$0x3]
      %v364 = vmul.f32 %v363, %v289
      %vm365 = vcmp.eq.s32.totalorder %v234, 1
      %vm366 = vcmp.eq.s32.totalorder %v260, 1
      %v367 = vsel %vm365, %v364, 0.0
      %v368 = vsel %vm299, %v367, 0.0
      %v369 = vrot.slane %v368, 4
      %v370 = vadd.f32 %v368, %v369
      %v371 = vrot.slane %v370, 2
      %v372 = vadd.f32 %v370, %v371
      %v373 = vrot.slane %v372, 1
      %v374 = vadd.f32 %v372, %v373
      %v375 = vsel %vm299, %v364, 0.0
      %v376 = vrot.slane %v375, 4
      %v377 = vadd.f32 %v375, %v376
      %v378 = vrot.slane %v377, 2
      %v379 = vadd.f32 %v377, %v378
      %v380 = vrot.slane %v379, 1
      %v381 = vadd.f32 %v379, %v380
      %v382 = vsel %vm365, 1.0, 0.0
      %v383 = vsel %vm299, %v382, 0.0
      %v384 = vrot.slane %v383, 4
      %v385 = vadd.f32 %v383, %v384
      %v386 = vrot.slane %v385, 2
      %v387 = vadd.f32 %v385, %v386
      %v388 = vrot.slane %v387, 1
      %v389 = vadd.f32 %v387, %v388
      %v390 = vsub.f32 %v292, %v362
      %v391 = vsel %vm365, %v390, 0.0
      %v392 = vsel %vm299, %v391, 0.0
      %v393 = vrot.slane %v392, 4
      %v394 = vadd.f32 %v392, %v393
      %v395 = vrot.slane %v394, 2
      %v396 = vadd.f32 %v394, %v395
      %v397 = vrot.slane %v396, 1
      %v398 = vadd.f32 %v396, %v397
      %v399 = vsel %vm366, 1.0, 0.0
      %v400 = vsel %vm299, %v399, 0.0
      %v401 = vrot.slane %v400, 4
      %v402 = vadd.f32 %v400, %v401
      %v403 = vrot.slane %v402, 2
      %v404 = vadd.f32 %v402, %v403
      %v405 = vrot.slane %v404, 1
      %v406 = vadd.f32 %v404, %v405
      %vm407 = vmand %vm365, %vm366
      %v408 = vsel %vm407, 1.0, 0.0
      %v409 = vsel %vm299, %v408, 0.0
      %v410 = vrot.slane %v409, 4
      %v411 = vadd.f32 %v409, %v410
      %v412 = vrot.slane %v411, 2
      %v413 = vadd.f32 %v411, %v412
      %v414 = vrot.slane %v413, 1
      %v415 = vadd.f32 %v413, %v414
      %v416 = vsel %vm348, %v374, %v381
      %v417 = vsel %vm299, %v416, %v389
      %v418 = vsel %vm351, %v417, %v398
      %v419 = vsel %vm353, %v418, %v406
      %v420 = vsel %vm355, %v419, %v415
      %v421 = vsel %vm357, %v420, 0.0
      %v422 = vld [vmem:[%s225 + $0x8] sm:$0xff]
      %v423 = vadd.f32 %v422, %v421
      %424 = vst [vmem:[%s225 + $0x8] sm:$0xff] %v423
      %v425 = vld [vmem:[%s248] sm:$0x3]
      %v426 = vld [vmem:[%s278] sm:$0x3]
      %v427 = vmul.f32 %v426, %v289
      %vm428 = vcmp.eq.s32.totalorder %v234, 2
      %vm429 = vcmp.eq.s32.totalorder %v260, 2
      %v430 = vsel %vm428, %v427, 0.0
      %v431 = vsel %vm299, %v430, 0.0
      %v432 = vrot.slane %v431, 4
      %v433 = vadd.f32 %v431, %v432
      %v434 = vrot.slane %v433, 2
      %v435 = vadd.f32 %v433, %v434
      %v436 = vrot.slane %v435, 1
      %v437 = vadd.f32 %v435, %v436
      %v438 = vsel %vm299, %v427, 0.0
      %v439 = vrot.slane %v438, 4
      %v440 = vadd.f32 %v438, %v439
      %v441 = vrot.slane %v440, 2
      %v442 = vadd.f32 %v440, %v441
      %v443 = vrot.slane %v442, 1
      %v444 = vadd.f32 %v442, %v443
      %v445 = vsel %vm428, 1.0, 0.0
      %v446 = vsel %vm299, %v445, 0.0
      %v447 = vrot.slane %v446, 4
      %v448 = vadd.f32 %v446, %v447
      %v449 = vrot.slane %v448, 2
      %v450 = vadd.f32 %v448, %v449
      %v451 = vrot.slane %v450, 1
      %v452 = vadd.f32 %v450, %v451
      %v453 = vsub.f32 %v292, %v425
      %v454 = vsel %vm428, %v453, 0.0
      %v455 = vsel %vm299, %v454, 0.0
      %v456 = vrot.slane %v455, 4
      %v457 = vadd.f32 %v455, %v456
      %v458 = vrot.slane %v457, 2
      %v459 = vadd.f32 %v457, %v458
      %v460 = vrot.slane %v459, 1
      %v461 = vadd.f32 %v459, %v460
      %v462 = vsel %vm429, 1.0, 0.0
      %v463 = vsel %vm299, %v462, 0.0
      %v464 = vrot.slane %v463, 4
      %v465 = vadd.f32 %v463, %v464
      %v466 = vrot.slane %v465, 2
      %v467 = vadd.f32 %v465, %v466
      %v468 = vrot.slane %v467, 1
      %v469 = vadd.f32 %v467, %v468
      %vm470 = vmand %vm428, %vm429
      %v471 = vsel %vm470, 1.0, 0.0
      %v472 = vsel %vm299, %v471, 0.0
      %v473 = vrot.slane %v472, 4
      %v474 = vadd.f32 %v472, %v473
      %v475 = vrot.slane %v474, 2
      %v476 = vadd.f32 %v474, %v475
      %v477 = vrot.slane %v476, 1
      %v478 = vadd.f32 %v476, %v477
      %v479 = vsel %vm348, %v437, %v444
      %v480 = vsel %vm299, %v479, %v452
      %v481 = vsel %vm351, %v480, %v461
      %v482 = vsel %vm353, %v481, %v469
      %v483 = vsel %vm355, %v482, %v478
      %v484 = vsel %vm357, %v483, 0.0
      %v485 = vld [vmem:[%s225 + $0x10] sm:$0xff]
      %v486 = vadd.f32 %v485, %v484
      %487 = vst [vmem:[%s225 + $0x10] sm:$0xff] %v486
      %v488 = vld [vmem:[%s256] sm:$0x3]
      %v489 = vld [vmem:[%s285] sm:$0x3]
      %v490 = vmul.f32 %v489, %v289
      %vm491 = vcmp.eq.s32.totalorder %v234, 3
      %vm492 = vcmp.eq.s32.totalorder %v260, 3
      %v493 = vsel %vm491, %v490, 0.0
      %v494 = vsel %vm299, %v493, 0.0
      %v495 = vrot.slane %v494, 4
      %v496 = vadd.f32 %v494, %v495
      %v497 = vrot.slane %v496, 2
      %v498 = vadd.f32 %v496, %v497
      %v499 = vrot.slane %v498, 1
      %v500 = vadd.f32 %v498, %v499
      %v501 = vsel %vm299, %v490, 0.0
      %v502 = vrot.slane %v501, 4
      %v503 = vadd.f32 %v501, %v502
      %v504 = vrot.slane %v503, 2
      %v505 = vadd.f32 %v503, %v504
      %v506 = vrot.slane %v505, 1
      %v507 = vadd.f32 %v505, %v506
      %v508 = vsel %vm491, 1.0, 0.0
      %v509 = vsel %vm299, %v508, 0.0
      %v510 = vrot.slane %v509, 4
      %v511 = vadd.f32 %v509, %v510
      %v512 = vrot.slane %v511, 2
      %v513 = vadd.f32 %v511, %v512
      %v514 = vrot.slane %v513, 1
      %v515 = vadd.f32 %v513, %v514
      %v516 = vsub.f32 %v292, %v488
      %v517 = vsel %vm491, %v516, 0.0
      %v518 = vsel %vm299, %v517, 0.0
      %v519 = vrot.slane %v518, 4
      %v520 = vadd.f32 %v518, %v519
      %v521 = vrot.slane %v520, 2
      %v522 = vadd.f32 %v520, %v521
      %v523 = vrot.slane %v522, 1
      %v524 = vadd.f32 %v522, %v523
      %v525 = vsel %vm492, 1.0, 0.0
      %v526 = vsel %vm299, %v525, 0.0
      %v527 = vrot.slane %v526, 4
      %v528 = vadd.f32 %v526, %v527
      %v529 = vrot.slane %v528, 2
      %v530 = vadd.f32 %v528, %v529
      %v531 = vrot.slane %v530, 1
      %v532 = vadd.f32 %v530, %v531
      %vm533 = vmand %vm491, %vm492
      %v534 = vsel %vm533, 1.0, 0.0
      %v535 = vsel %vm299, %v534, 0.0
      %v536 = vrot.slane %v535, 4
      %v537 = vadd.f32 %v535, %v536
      %v538 = vrot.slane %v537, 2
      %v539 = vadd.f32 %v537, %v538
      %v540 = vrot.slane %v539, 1
      %v541 = vadd.f32 %v539, %v540
      %v542 = vsel %vm348, %v500, %v507
      %v543 = vsel %vm299, %v542, %v515
      %v544 = vsel %vm351, %v543, %v524
      %v545 = vsel %vm353, %v544, %v532
      %v546 = vsel %vm355, %v545, %v541
      %v547 = vsel %vm357, %v546, 0.0
      %v548 = vld [vmem:[%s225 + $0x18] sm:$0xff]
      %v549 = vadd.f32 %v548, %v547
      %550 = vst [vmem:[%s225 + $0x18] sm:$0xff] %v549
      %p551 = scmp.lt.s32.totalorder %s18, 0
      %s552 = scalar_select %p551, %s18, 0
      %p553 = scmp.lt.s32.totalorder %s19, 1
      %s554 = scalar_select %p553, %s19, 1
      %s555 = smul.addr %s554, 4
      %s556 = smul.addr %s552, 8
      %s557 = sadd.s32 %s555, %s556
      %s558 = smul.addr %s557, 8
      %s559 = scalar_lea.vmem %s2, %s558
      // Predicated region
      $region33: #{_loss_impl.1} parent=27 // pred_check
        %p560 = pneg %p112
      $region34: #{_loss_impl.1} parent=27 // pred_check_branch
        %562 = sbr.rel (%p560) target = $region36
      $region35: #{_loss_impl.1} parent=27 // pred_region
        _
      $region36: #{_loss_impl.1} parent=27 // pred_fallthru
        _
    $region28: #{_loss_impl.1} parent=5 // pred_fallthru
      _
    %p563 = scmp.le.s32.totalorder 2, %s8
    // Predicated region
    $region37: #{_loss_impl.1} parent=5 // pred_check
      %p564 = pneg %p563
    $region38: #{_loss_impl.1} parent=5 // pred_check_branch
      %566 = sbr.rel (%p564) target = $region40
    $region39: #{_loss_impl.1} parent=5 // pred_region
      %s567 = ssub.s32 %s8, 2
      // Predicated region
      $region41: #{_loss_impl.1} parent=39 // pred_check
        %p568 = pneg %p118
      $region42: #{_loss_impl.1} parent=39 // pred_check_branch
        %570 = sbr.rel (%p568) target = $region44
      $region43: #{_loss_impl.1} parent=39 // pred_region
        %p571 = scmp.lt.s32.totalorder %s21, 0
        %s572 = scalar_select %p571, %s21, 0
        %p573 = scmp.lt.s32.totalorder %s22, 1
        %s574 = scalar_select %p573, %s22, 1
        %s575 = smul.addr %s574, 4
        %s576 = smul.addr %s572, 8
        %s577 = sadd.s32 %s575, %s576
        %s578 = smul.addr %s577, 8
        %s579 = scalar_lea.vmem %s2, %s578
      $region44: #{_loss_impl.1} parent=39 // pred_fallthru
        _
    $region40: #{_loss_impl.1} parent=5 // pred_fallthru
      _
  $region6: #{_loss_impl.1} parent=0 // loop_footer
    %s12 = sadd.s32 1, %s8
  $region7: #{_loss_impl.1} parent=0 // loop_footer_branch
    %7 = sbr.rel target = $region3
  $region8: #{_loss_impl.1} parent=0 // loop_exit
    _

</llo_original>
